<compile_context>
chip_gen: v6e
topology: v6e:2x2x1
jax: 0.10.0
libtpu: 0.0.40
codegen_flags: <defaults>
</compile_context>

<pallas_src>
import math
from functools import partial

import jax
import jax.numpy as jnp
from jax.experimental import pallas as pl
from jax.experimental.pallas import tpu as pltpu


# ------------------------------ fused kernel --------------------------------

def _fused_kernel(x_ref, k1_ref, b1_ref, k2_ref, b2_ref, ks_ref, bs_ref,
                  o_ref, *, w0, H):
    """Whole-network forward for one block of rows (whole images).

    Activations use an (rows, C*W) layout: rows = (image, h) flattened,
    lanes = channel-major (c*W + w), always 128 wide.

    x_ref : (R, Cp*W)       input rows (channels zero-padded to Cp)
    k1_ref: (3*Cp*W, C1*W)  conv1 banded weight, kh slabs stacked along K
    b1_ref: (1, C1*W)
    k2_ref: (3*C1*W, C2*W)  conv2 banded weight
    b2_ref: (1, C2*W)
    ks_ref: (C2*W, C2*W)    block-diagonal Siren weight (siren_w.T per channel)
    bs_ref: (1, C2*W)
    o_ref : (R, C2*W)
    """

    def shift_rows(a, direction):
        # Row r of result = row (r - direction) of `a` *within the same image*;
        # zero where that row falls outside the image (conv padding=1 along H).
        # pltpu.roll runs on the XLU (free slot) -> no VMEM scratch round trip,
        # no sublane-unaligned masked loads/stores.
        R, L = a.shape
        rolled = pltpu.roll(a, shift=direction % R, axis=0)
        h = jax.lax.broadcasted_iota(jnp.int32, (R, L), 0) % H
        ok = (h != 0) if direction == 1 else (h != H - 1)
        return jnp.where(ok, rolled, 0.0)

    def conv3x3(a, k_ref, b_ref):
        # One fused MXU push per conv: operand (R, 3*L) = [above | row | below],
        # weight (3*L, Lout) = [K_kh0; K_kh1; K_kh2]; W-padding folded into K.
        a_cat = jnp.concatenate([shift_rows(a, 1), a, shift_rows(a, -1)], axis=1)
        acc = jnp.dot(a_cat, k_ref[...], preferred_element_type=jnp.float32)
        return jnp.maximum(acc + b_ref[...], 0.0)

    a1 = conv3x3(x_ref[...], k1_ref, b1_ref)
    a2 = conv3x3(a1, k2_ref, b2_ref)

    # Siren: sin(w0 * (F.linear over W)) as one block-diagonal matmul.
    y = jnp.dot(a2, ks_ref[...], preferred_element_type=jnp.float32) + bs_ref[...]
    o_ref[...] = jnp.sin(w0 * y)


# ------------------------- one-time weight plumbing ---------------------------

def _conv_to_banded_stacked(weight, W, cin_pad):
    """(Cout, Cin, 3, 3) conv weight -> (3*cin_pad*W, Cout*W) stacked banded
    matrix acting on the [ci*W + wi] lane axis.  The three kernel-row (kh)
    slabs are stacked along the contraction dim (to pair with the in-kernel
    [above | row | below] operand); W-direction padding=1 becomes zero band
    edges; the input-channel dim is zero-padded to cin_pad.
    """
    weight = jnp.asarray(weight, jnp.float32)
    Cout, Cin, KH, KW = weight.shape
    wi = jnp.arange(W)[:, None]                      # (W, 1)
    wo = jnp.arange(W)[None, :]                      # (1, W)
    kw = wi - wo + 1                                 # (W, W)
    valid = (kw >= 0) & (kw <= KW - 1)
    kwc = jnp.clip(kw, 0, KW - 1)
    wt = jnp.transpose(weight, (2, 1, 0, 3))         # (KH, Cin, Cout, KW)
    K5 = wt[:, :, :, kwc]                            # (KH, Cin, Cout, W, W)
    K5 = jnp.where(valid[None, None, None], K5, 0.0)
    K = jnp.transpose(K5, (0, 1, 3, 2, 4)).reshape(KH, Cin * W, Cout * W)
    if cin_pad > Cin:
        K = jnp.pad(K, ((0, 0), (0, (cin_pad - Cin) * W), (0, 0)))
    return K.reshape(KH * cin_pad * W, Cout * W)


def prepare_weights(params, W, cin_pad):
    """One-time preprocessing (HOISTED out of the per-call hot path)."""
    C1 = params["conv1_w"].shape[0]
    C2 = params["conv2_w"].shape[0]
    return dict(
        k1=_conv_to_banded_stacked(params["conv1_w"], W, cin_pad),
        b1=jnp.repeat(params["conv1_b"].astype(jnp.float32), W).reshape(1, C1 * W),
        k2=_conv_to_banded_stacked(params["conv2_w"], W, C1),
        b2=jnp.repeat(params["conv2_b"].astype(jnp.float32), W).reshape(1, C2 * W),
        ks=jnp.kron(jnp.eye(C2, dtype=jnp.float32),
                    params["siren_w"].T.astype(jnp.float32)),
        bs=jnp.tile(params["siren_b"].astype(jnp.float32), C2).reshape(1, C2 * W),
    )


# ------------------------------ forward pass ---------------------------------

def siren_fcn_forward(prep, x, w0=1.0):
    """SirenAndFcn forward: fcn (conv-relu-conv-relu) then Siren over W."""
    N, Cin, H, W = x.shape
    k1, b1 = prep["k1"], prep["b1"]
    k2, b2 = prep["k2"], prep["b2"]
    ks, bs = prep["ks"], prep["bs"]
    cin_pad_W = k1.shape[0] // 3          # padded Cin * W  (= 128)
    C1W = k2.shape[0] // 3                # C1 * W
    C2W = ks.shape[1]                     # C2 * W
    M = N * H

    # Layout glue (tiny, overlapped with the kernel via the cost estimate):
    # NCHW -> (N*H, Cin*W) rows, lanes channel-major, zero-padded to 128 lanes.
    xr = jnp.transpose(x, (0, 2, 1, 3)).reshape(M, Cin * W)
    if cin_pad_W > Cin * W:
        xr = jnp.pad(xr, ((0, 0), (0, cin_pad_W - Cin * W)))

    # One big-M step for small batches (MXU sees M = N*H); two "parallel"
    # row-blocks (whole images each) once the batch can feed both v7x cores.
    num_blocks = 2 if (N >= 8 and N % 2 == 0) else 1
    R = M // num_blocks

    flops = 2 * M * (3 * cin_pad_W * C1W + 3 * C1W * C2W + C2W * C2W)
    bytes_accessed = 4 * (xr.size + k1.size + b1.size + k2.size + b2.size
                          + ks.size + bs.size + M * C2W)

    out = pl.pallas_call(
        partial(_fused_kernel, w0=w0, H=H),
        out_shape=jax.ShapeDtypeStruct((M, C2W), jnp.float32),
        grid=(num_blocks,),
        in_specs=[
            pl.BlockSpec((R, cin_pad_W), lambda i: (i, 0)),
            pl.BlockSpec(k1.shape, lambda i: (0, 0)),
            pl.BlockSpec(b1.shape, lambda i: (0, 0)),
            pl.BlockSpec(k2.shape, lambda i: (0, 0)),
            pl.BlockSpec(b2.shape, lambda i: (0, 0)),
            pl.BlockSpec(ks.shape, lambda i: (0, 0)),
            pl.BlockSpec(bs.shape, lambda i: (0, 0)),
        ],
        out_specs=pl.BlockSpec((R, C2W), lambda i: (i, 0)),
        compiler_params=pltpu.CompilerParams(
            dimension_semantics=("parallel",)),
        cost_estimate=pl.CostEstimate(
            flops=flops,
            transcendentals=M * C2W,
            bytes_accessed=bytes_accessed),
    )(xr, k1, b1, k2, b2, ks, bs)

    # (N*H, C2*W) -> NCHW (pure layout plumbing on the tiny final result).
    C2 = C2W // W
    return out.reshape(N, H, C2, W).transpose(0, 2, 1, 3)


# ------------------------------- parameters ----------------------------------

def init_params(key):
    ks = jax.random.split(key, 6)

    def conv_init(kw_, kb_, cout, cin, k):
        # PyTorch Conv2d default: uniform(-1/sqrt(fan_in), 1/sqrt(fan_in))
        fan_in = cin * k * k
        bound = 1.0 / math.sqrt(fan_in)
        w = jax.random.uniform(kw_, (cout, cin, k, k), jnp.float32, -bound, bound)
        b = jax.random.uniform(kb_, (cout,), jnp.float32, -bound, bound)
        return w, b

    def siren_init(kw_, kb_, dim, w0=1.0, c=6.0):
        # Siren with is_first=False: w_std = sqrt(c / dim_in) / w0
        w_std = math.sqrt(c / dim) / w0
        w = jax.random.uniform(kw_, (dim, dim), jnp.float32, -w_std, w_std)
        b = jax.random.uniform(kb_, (dim,), jnp.float32, -w_std, w_std)
        return w, b

    p = {}
    p["conv1_w"], p["conv1_b"] = conv_init(ks[0], ks[1], 8, 4, 3)
    p["conv2_w"], p["conv2_b"] = conv_init(ks[2], ks[3], 8, 8, 3)
    p["siren_w"], p["siren_b"] = siren_init(ks[4], ks[5], 16)   # Siren(w_in=16)
    return p


# ------------------------------- reference -----------------------------------

def reference_forward(params, x, w0=1.0):
    """Pure-JAX reference mirroring the PyTorch semantics."""
    def conv(x, w, b):
        y = jax.lax.conv_general_dilated(
            x, w, window_strides=(1, 1), padding=((1, 1), (1, 1)),
            dimension_numbers=("NCHW", "OIHW", "NCHW"))
        return y + b.reshape(1, -1, 1, 1)

    x = jnp.maximum(conv(x, params["conv1_w"], params["conv1_b"]), 0.0)
    x = jnp.maximum(conv(x, params["conv2_w"], params["conv2_b"]), 0.0)
    x = jnp.sin(w0 * (jnp.einsum("nchw,ow->ncho", x, params["siren_w"])
                      + params["siren_b"]))
    return x


# ----------------------------------- main -------------------------------------

if __name__ == "__main__":
    key = jax.random.PRNGKey(0)
    pkey, xkey = jax.random.split(key)
    params = init_params(pkey)
    x = jax.random.normal(xkey, (2, 4, 16, 16), jnp.float32)   # NCHW

    # One-time weight preprocessing, hoisted out of the jitted forward.
    W = x.shape[3]
    prep = jax.tree_util.tree_map(jax.block_until_ready,
                                  prepare_weights(params, W, cin_pad=8))

    fwd = jax.jit(siren_fcn_forward)
    out = jax.block_until_ready(fwd(prep, x))

    ref = reference_forward(params, x)
    assert out.shape == (2, 8, 16, 16), out.shape
    max_err = float(jnp.max(jnp.abs(out - ref)))
    assert jnp.allclose(out, ref, atol=1e-4, rtol=1e-4), max_err
    print("KERNEL_OK")
</pallas_src>

<mosaic_0001>
module attributes {stable_mosaic.version = 11 : i64} {
  func.func @_fused_kernel(%arg0: i32, %arg1: memref<32x128xf32, #tpu.memory_space<vmem>>, %arg2: memref<384x128xf32, #tpu.memory_space<vmem>>, %arg3: memref<1x128xf32, #tpu.memory_space<vmem>>, %arg4: memref<384x128xf32, #tpu.memory_space<vmem>>, %arg5: memref<1x128xf32, #tpu.memory_space<vmem>>, %arg6: memref<128x128xf32, #tpu.memory_space<vmem>>, %arg7: memref<1x128xf32, #tpu.memory_space<vmem>>, %arg8: memref<32x128xf32, #tpu.memory_space<vmem>>) attributes {dimension_semantics = [#tpu.dimension_semantics<parallel>], iteration_bounds = array<i64: 1>, scalar_prefetch = 0 : i64, scratch_operands = 0 : i64, tpu.core_type = #tpu.core_type<tc>, window_params = [{transform_indices = @transform_0, window_bounds = array<i64: 32, 128>}, {pipeline_mode = #tpu.pipeline_mode<synchronous>, transform_indices = @transform_1, window_bounds = array<i64: 384, 128>}, {pipeline_mode = #tpu.pipeline_mode<synchronous>, transform_indices = @transform_2, window_bounds = array<i64: 1, 128>}, {pipeline_mode = #tpu.pipeline_mode<synchronous>, transform_indices = @transform_3, window_bounds = array<i64: 384, 128>}, {pipeline_mode = #tpu.pipeline_mode<synchronous>, transform_indices = @transform_4, window_bounds = array<i64: 1, 128>}, {pipeline_mode = #tpu.pipeline_mode<synchronous>, transform_indices = @transform_5, window_bounds = array<i64: 128, 128>}, {pipeline_mode = #tpu.pipeline_mode<synchronous>, transform_indices = @transform_6, window_bounds = array<i64: 1, 128>}, {transform_indices = @transform_7, window_bounds = array<i64: 32, 128>}]} {
    %c0 = arith.constant 0 : index
    %c0_0 = arith.constant 0 : index
    %0 = vector.load %arg1[%c0, %c0_0] : memref<32x128xf32, #tpu.memory_space<vmem>>, vector<32x128xf32>
    %c1_i32 = arith.constant 1 : i32
    %1 = tpu.dynamic_rotate %0 by %c1_i32 dim 0 : vector<32x128xf32>, i32 -> vector<32x128xf32>
    %2 = tpu.iota {dimensions = array<i32: 0>} : vector<32x128xi32>
    %c16_i32 = arith.constant 16 : i32
    %c0_i32 = arith.constant 0 : i32
    %3 = arith.cmpi eq, %c16_i32, %c0_i32 : i32
    %c1_i32_1 = arith.constant 1 : i32
    %4 = arith.select %3, %c1_i32_1, %c16_i32 : i32
    %5 = vector.broadcast %4 : i32 to vector<32x128xi32>
    %6 = arith.remsi %2, %5 : vector<32x128xi32>
    %c0_i32_2 = arith.constant 0 : i32
    %7 = vector.broadcast %c0_i32_2 : i32 to vector<32x128xi32>
    %8 = arith.cmpi ne, %6, %7 : vector<32x128xi32>
    %c0_i32_3 = arith.constant 0 : i32
    %9 = vector.broadcast %c0_i32_3 : i32 to vector<32x128xi32>
    %10 = arith.cmpi slt, %6, %9 : vector<32x128xi32>
    %c0_i32_4 = arith.constant 0 : i32
    %11 = arith.cmpi slt, %4, %c0_i32_4 : i32
    %12 = vector.broadcast %11 : i1 to vector<32x128xi1>
    %13 = vector.broadcast %12 : vector<32x128xi1> to vector<32x128xi1>
    %14 = arith.xori %10, %13 : vector<32x128xi1>
    %15 = arith.andi %14, %8 : vector<32x128xi1>
    %16 = vector.broadcast %4 : i32 to vector<32x128xi32>
    %17 = arith.addi %6, %16 : vector<32x128xi32>
    %18 = arith.select %15, %17, %6 : vector<32x128xi1>, vector<32x128xi32>
    %c0_i32_5 = arith.constant 0 : i32
    %19 = vector.broadcast %c0_i32_5 : i32 to vector<32x128xi32>
    %20 = arith.cmpi ne, %18, %19 : vector<32x128xi32>
    %cst = arith.constant 0.000000e+00 : f32
    %21 = vector.broadcast %cst : f32 to vector<32x128xf32>
    %22 = arith.select %20, %1, %21 : vector<32x128xi1>, vector<32x128xf32>
    %c31_i32 = arith.constant 31 : i32
    %23 = tpu.dynamic_rotate %0 by %c31_i32 dim 0 : vector<32x128xf32>, i32 -> vector<32x128xf32>
    %24 = tpu.iota {dimensions = array<i32: 0>} : vector<32x128xi32>
    %c16_i32_6 = arith.constant 16 : i32
    %c0_i32_7 = arith.constant 0 : i32
    %25 = arith.cmpi eq, %c16_i32_6, %c0_i32_7 : i32
    %c1_i32_8 = arith.constant 1 : i32
    %26 = arith.select %25, %c1_i32_8, %c16_i32_6 : i32
    %27 = vector.broadcast %26 : i32 to vector<32x128xi32>
    %28 = arith.remsi %24, %27 : vector<32x128xi32>
    %c0_i32_9 = arith.constant 0 : i32
    %29 = vector.broadcast %c0_i32_9 : i32 to vector<32x128xi32>
    %30 = arith.cmpi ne, %28, %29 : vector<32x128xi32>
    %c0_i32_10 = arith.constant 0 : i32
    %31 = vector.broadcast %c0_i32_10 : i32 to vector<32x128xi32>
    %32 = arith.cmpi slt, %28, %31 : vector<32x128xi32>
    %c0_i32_11 = arith.constant 0 : i32
    %33 = arith.cmpi slt, %26, %c0_i32_11 : i32
    %34 = vector.broadcast %33 : i1 to vector<32x128xi1>
    %35 = vector.broadcast %34 : vector<32x128xi1> to vector<32x128xi1>
    %36 = arith.xori %32, %35 : vector<32x128xi1>
    %37 = arith.andi %36, %30 : vector<32x128xi1>
    %38 = vector.broadcast %26 : i32 to vector<32x128xi32>
    %39 = arith.addi %28, %38 : vector<32x128xi32>
    %40 = arith.select %37, %39, %28 : vector<32x128xi1>, vector<32x128xi32>
    %c15_i32 = arith.constant 15 : i32
    %41 = vector.broadcast %c15_i32 : i32 to vector<32x128xi32>
    %42 = arith.cmpi ne, %40, %41 : vector<32x128xi32>
    %cst_12 = arith.constant 0.000000e+00 : f32
    %43 = vector.broadcast %cst_12 : f32 to vector<32x128xf32>
    %44 = arith.select %42, %23, %43 : vector<32x128xi1>, vector<32x128xf32>
    %45 = tpu.concatenate %22, %0, %44 in 1 : vector<32x128xf32>, vector<32x128xf32>, vector<32x128xf32> -> vector<32x384xf32>
    %c0_13 = arith.constant 0 : index
    %c0_14 = arith.constant 0 : index
    %46 = vector.load %arg2[%c0_13, %c0_14] : memref<384x128xf32, #tpu.memory_space<vmem>>, vector<384x128xf32>
    %cst_15 = arith.constant dense<0.000000e+00> : vector<32x128xf32>
    %47 = tpu.matmul %45, %46, %cst_15 {dimension_numbers = #tpu.dot_dimension_numbers<[1], [0], [0], [1], [0, 0, 1, 1], [], []>} : vector<32x384xf32>, vector<384x128xf32>, vector<32x128xf32> -> vector<32x128xf32>
    %c0_16 = arith.constant 0 : index
    %c0_17 = arith.constant 0 : index
    %48 = vector.load %arg3[%c0_16, %c0_17] : memref<1x128xf32, #tpu.memory_space<vmem>>, vector<1x128xf32>
    %49 = vector.broadcast %48 : vector<1x128xf32> to vector<32x128xf32>
    %50 = arith.addf %47, %49 : vector<32x128xf32>
    %cst_18 = arith.constant 0.000000e+00 : f32
    %51 = vector.broadcast %cst_18 : f32 to vector<32x128xf32>
    %52 = arith.maximumf %50, %51 : vector<32x128xf32>
    %c1_i32_19 = arith.constant 1 : i32
    %53 = tpu.dynamic_rotate %52 by %c1_i32_19 dim 0 : vector<32x128xf32>, i32 -> vector<32x128xf32>
    %54 = tpu.iota {dimensions = array<i32: 0>} : vector<32x128xi32>
    %c16_i32_20 = arith.constant 16 : i32
    %c0_i32_21 = arith.constant 0 : i32
    %55 = arith.cmpi eq, %c16_i32_20, %c0_i32_21 : i32
    %c1_i32_22 = arith.constant 1 : i32
    %56 = arith.select %55, %c1_i32_22, %c16_i32_20 : i32
    %57 = vector.broadcast %56 : i32 to vector<32x128xi32>
    %58 = arith.remsi %54, %57 : vector<32x128xi32>
    %c0_i32_23 = arith.constant 0 : i32
    %59 = vector.broadcast %c0_i32_23 : i32 to vector<32x128xi32>
    %60 = arith.cmpi ne, %58, %59 : vector<32x128xi32>
    %c0_i32_24 = arith.constant 0 : i32
    %61 = vector.broadcast %c0_i32_24 : i32 to vector<32x128xi32>
    %62 = arith.cmpi slt, %58, %61 : vector<32x128xi32>
    %c0_i32_25 = arith.constant 0 : i32
    %63 = arith.cmpi slt, %56, %c0_i32_25 : i32
    %64 = vector.broadcast %63 : i1 to vector<32x128xi1>
    %65 = vector.broadcast %64 : vector<32x128xi1> to vector<32x128xi1>
    %66 = arith.xori %62, %65 : vector<32x128xi1>
    %67 = arith.andi %66, %60 : vector<32x128xi1>
    %68 = vector.broadcast %56 : i32 to vector<32x128xi32>
    %69 = arith.addi %58, %68 : vector<32x128xi32>
    %70 = arith.select %67, %69, %58 : vector<32x128xi1>, vector<32x128xi32>
    %c0_i32_26 = arith.constant 0 : i32
    %71 = vector.broadcast %c0_i32_26 : i32 to vector<32x128xi32>
    %72 = arith.cmpi ne, %70, %71 : vector<32x128xi32>
    %cst_27 = arith.constant 0.000000e+00 : f32
    %73 = vector.broadcast %cst_27 : f32 to vector<32x128xf32>
    %74 = arith.select %72, %53, %73 : vector<32x128xi1>, vector<32x128xf32>
    %c31_i32_28 = arith.constant 31 : i32
    %75 = tpu.dynamic_rotate %52 by %c31_i32_28 dim 0 : vector<32x128xf32>, i32 -> vector<32x128xf32>
    %76 = tpu.iota {dimensions = array<i32: 0>} : vector<32x128xi32>
    %c16_i32_29 = arith.constant 16 : i32
    %c0_i32_30 = arith.constant 0 : i32
    %77 = arith.cmpi eq, %c16_i32_29, %c0_i32_30 : i32
    %c1_i32_31 = arith.constant 1 : i32
    %78 = arith.select %77, %c1_i32_31, %c16_i32_29 : i32
    %79 = vector.broadcast %78 : i32 to vector<32x128xi32>
    %80 = arith.remsi %76, %79 : vector<32x128xi32>
    %c0_i32_32 = arith.constant 0 : i32
    %81 = vector.broadcast %c0_i32_32 : i32 to vector<32x128xi32>
    %82 = arith.cmpi ne, %80, %81 : vector<32x128xi32>
    %c0_i32_33 = arith.constant 0 : i32
    %83 = vector.broadcast %c0_i32_33 : i32 to vector<32x128xi32>
    %84 = arith.cmpi slt, %80, %83 : vector<32x128xi32>
    %c0_i32_34 = arith.constant 0 : i32
    %85 = arith.cmpi slt, %78, %c0_i32_34 : i32
    %86 = vector.broadcast %85 : i1 to vector<32x128xi1>
    %87 = vector.broadcast %86 : vector<32x128xi1> to vector<32x128xi1>
    %88 = arith.xori %84, %87 : vector<32x128xi1>
    %89 = arith.andi %88, %82 : vector<32x128xi1>
    %90 = vector.broadcast %78 : i32 to vector<32x128xi32>
    %91 = arith.addi %80, %90 : vector<32x128xi32>
    %92 = arith.select %89, %91, %80 : vector<32x128xi1>, vector<32x128xi32>
    %c15_i32_35 = arith.constant 15 : i32
    %93 = vector.broadcast %c15_i32_35 : i32 to vector<32x128xi32>
    %94 = arith.cmpi ne, %92, %93 : vector<32x128xi32>
    %cst_36 = arith.constant 0.000000e+00 : f32
    %95 = vector.broadcast %cst_36 : f32 to vector<32x128xf32>
    %96 = arith.select %94, %75, %95 : vector<32x128xi1>, vector<32x128xf32>
    %97 = tpu.concatenate %74, %52, %96 in 1 : vector<32x128xf32>, vector<32x128xf32>, vector<32x128xf32> -> vector<32x384xf32>
    %c0_37 = arith.constant 0 : index
    %c0_38 = arith.constant 0 : index
    %98 = vector.load %arg4[%c0_37, %c0_38] : memref<384x128xf32, #tpu.memory_space<vmem>>, vector<384x128xf32>
    %cst_39 = arith.constant dense<0.000000e+00> : vector<32x128xf32>
    %99 = tpu.matmul %97, %98, %cst_39 {dimension_numbers = #tpu.dot_dimension_numbers<[1], [0], [0], [1], [0, 0, 1, 1], [], []>} : vector<32x384xf32>, vector<384x128xf32>, vector<32x128xf32> -> vector<32x128xf32>
    %c0_40 = arith.constant 0 : index
    %c0_41 = arith.constant 0 : index
    %100 = vector.load %arg5[%c0_40, %c0_41] : memref<1x128xf32, #tpu.memory_space<vmem>>, vector<1x128xf32>
    %101 = vector.broadcast %100 : vector<1x128xf32> to vector<32x128xf32>
    %102 = arith.addf %99, %101 : vector<32x128xf32>
    %cst_42 = arith.constant 0.000000e+00 : f32
    %103 = vector.broadcast %cst_42 : f32 to vector<32x128xf32>
    %104 = arith.maximumf %102, %103 : vector<32x128xf32>
    %c0_43 = arith.constant 0 : index
    %c0_44 = arith.constant 0 : index
    %105 = vector.load %arg6[%c0_43, %c0_44] : memref<128x128xf32, #tpu.memory_space<vmem>>, vector<128x128xf32>
    %cst_45 = arith.constant dense<0.000000e+00> : vector<32x128xf32>
    %106 = tpu.matmul %104, %105, %cst_45 {dimension_numbers = #tpu.dot_dimension_numbers<[1], [0], [0], [1], [0, 0, 1, 1], [], []>} : vector<32x128xf32>, vector<128x128xf32>, vector<32x128xf32> -> vector<32x128xf32>
    %c0_46 = arith.constant 0 : index
    %c0_47 = arith.constant 0 : index
    %107 = vector.load %arg7[%c0_46, %c0_47] : memref<1x128xf32, #tpu.memory_space<vmem>>, vector<1x128xf32>
    %108 = vector.broadcast %107 : vector<1x128xf32> to vector<32x128xf32>
    %109 = arith.addf %106, %108 : vector<32x128xf32>
    %cst_48 = arith.constant 1.000000e+00 : f32
    %110 = vector.broadcast %cst_48 : f32 to vector<32x128xf32>
    %111 = arith.mulf %110, %109 : vector<32x128xf32>
    %112 = math.sin %111 : vector<32x128xf32>
    %c0_49 = arith.constant 0 : index
    %c0_50 = arith.constant 0 : index
    %113 = vector.load %arg8[%c0_49, %c0_50] : memref<32x128xf32, #tpu.memory_space<vmem>>, vector<32x128xf32>
    tpu.vector_store %arg8[%c0_49, %c0_50], %112 {strides = array<i32>} : memref<32x128xf32, #tpu.memory_space<vmem>>, vector<32x128xf32>,
    return
  }
  func.func @transform_0(%arg0: i32) -> (i32, i32) {
    %c0_i32 = arith.constant 0 : i32
    %c0_i32_0 = arith.constant 0 : i32
    return %arg0, %c0_i32 : i32, i32
  }
  func.func @transform_1(%arg0: i32) -> (i32, i32) {
    %c0_i32 = arith.constant 0 : i32
    %c0_i32_0 = arith.constant 0 : i32
    %c0_i32_1 = arith.constant 0 : i32
    return %c0_i32, %c0_i32_0 : i32, i32
  }
  func.func @transform_2(%arg0: i32) -> (i32, i32) {
    %c0_i32 = arith.constant 0 : i32
    %c0_i32_0 = arith.constant 0 : i32
    %c0_i32_1 = arith.constant 0 : i32
    return %c0_i32, %c0_i32_0 : i32, i32
  }
  func.func @transform_3(%arg0: i32) -> (i32, i32) {
    %c0_i32 = arith.constant 0 : i32
    %c0_i32_0 = arith.constant 0 : i32
    %c0_i32_1 = arith.constant 0 : i32
    return %c0_i32, %c0_i32_0 : i32, i32
  }
  func.func @transform_4(%arg0: i32) -> (i32, i32) {
    %c0_i32 = arith.constant 0 : i32
    %c0_i32_0 = arith.constant 0 : i32
    %c0_i32_1 = arith.constant 0 : i32
    return %c0_i32, %c0_i32_0 : i32, i32
  }
  func.func @transform_5(%arg0: i32) -> (i32, i32) {
    %c0_i32 = arith.constant 0 : i32
    %c0_i32_0 = arith.constant 0 : i32
    %c0_i32_1 = arith.constant 0 : i32
    return %c0_i32, %c0_i32_0 : i32, i32
  }
  func.func @transform_6(%arg0: i32) -> (i32, i32) {
    %c0_i32 = arith.constant 0 : i32
    %c0_i32_0 = arith.constant 0 : i32
    %c0_i32_1 = arith.constant 0 : i32
    return %c0_i32, %c0_i32_0 : i32, i32
  }
  func.func @transform_7(%arg0: i32) -> (i32, i32) {
    %c0_i32 = arith.constant 0 : i32
    %c0_i32_0 = arith.constant 0 : i32
    return %arg0, %c0_i32 : i32, i32
  }
}

</mosaic_0001>

<llo_original>
// kernel: siren_fcn_forward.1
$region0: #{siren_fcn_forward.1}
  #allocation0 [shape = 'u32[]', space=smem, size = 0x4, offset = 0x4, fixed_abs, tag = 'smem constant byte address 0x4 - core index']
  #allocation1 [shape = 'u32[144,128]{1,0:T(1,128)}', space=vmem, size = 0x12000, scoped, tag = 'internal scratch']
  %s0 = inlined_call_operand.vmem [shape: f32[32,128], index: 0, kind: input, shape index: {}]
  %s1 = inlined_call_operand.vmem [shape: f32[384,128], index: 1, kind: input, shape index: {}]
  %s2 = inlined_call_operand.vmem [shape: f32[1,128], index: 2, kind: input, shape index: {}]
  %s3 = inlined_call_operand.hbm [shape: f32[384,128], index: 3, kind: input, shape index: {}]
  %s4 = inlined_call_operand.vmem [shape: f32[1,128], index: 4, kind: input, shape index: {}]
  %s5 = inlined_call_operand.hbm [shape: f32[128,128], index: 5, kind: input, shape index: {}]
  %s6 = inlined_call_operand.vmem [shape: f32[1,128], index: 6, kind: input, shape index: {}]
  %s7 = inlined_call_operand.vmem [shape: f32[32,128], index: 7, kind: output, shape index: {}]
  %s8 = sld [smem:[#allocation0]]
  $region46: #{siren_fcn_forward.1} parent=0
    _
  %s10 = ssub.s32 1, %s8
  %s11 = scalar_select 0, %s10, %s8
  $region1: #{siren_fcn_forward.1} parent=0
    #allocation2 [shape = 'u8[196608]{0}', space=vmem, size = 0x30000, scoped, tag = 'input window, operand 3, single buffered']
    #allocation3 [shape = 's32[1]{0}', space=sflag, size = 0x4, scoped, tag = 'scoped memory for siren_fcn_forward.1']
    #allocation4 [shape = 'u8[65536]{0}', space=vmem, size = 0x10000, scoped, tag = 'input window, operand 5, single buffered']
    #allocation5 [shape = 's32[1]{0}', space=sflag, size = 0x4, scoped, tag = 'scoped memory for siren_fcn_forward.1']
    %12 = vsyncpa [#allocation3], 0
    %13 = vsyncpa [#allocation5], 0
    // Predicated region
    $region2: #{siren_fcn_forward.1} parent=1 // pred_check
      _
    $region3: #{siren_fcn_forward.1} parent=1 // pred_check_branch
      %15 = sbr.rel (0) target = $region5
    $region4: #{siren_fcn_forward.1} parent=1 // pred_region
      _
    $region5: #{siren_fcn_forward.1} parent=1 // pred_fallthru
      _
    // Predicated region
    $region6: #{siren_fcn_forward.1} parent=1 // pred_check
      _
    $region7: #{siren_fcn_forward.1} parent=1 // pred_check_branch
      %17 = sbr.rel (0) target = $region9
    $region8: #{siren_fcn_forward.1} parent=1 // pred_region
      _
    $region9: #{siren_fcn_forward.1} parent=1 // pred_fallthru
      _
    // Predicated region
    $region10: #{siren_fcn_forward.1} parent=1 // pred_check
      _
    $region11: #{siren_fcn_forward.1} parent=1 // pred_check_branch
      %19 = sbr.rel (0) target = $region13
    $region12: #{siren_fcn_forward.1} parent=1 // pred_region
      _
    $region13: #{siren_fcn_forward.1} parent=1 // pred_fallthru
      _
    // Predicated region
    $region14: #{siren_fcn_forward.1} parent=1 // pred_check
      _
    $region15: #{siren_fcn_forward.1} parent=1 // pred_check_branch
      %21 = sbr.rel (0) target = $region17
    $region16: #{siren_fcn_forward.1} parent=1 // pred_region
      %s23 = ssub.s32 6144, 6144
      %24 = vsyncadd [#allocation3], %s23
      %s25 = sshll.u32 [#allocation2], 4
      %s26 = int_to_ptr.vmem [resolvable:$true] %s25
      %31 = dma.hbm_to_vmem [thread:$0]  %s3, 6144, %s26, [#allocation3], 128, 128, 8
    $region17: #{siren_fcn_forward.1} parent=1 // pred_fallthru
      _
    // Predicated region
    $region18: #{siren_fcn_forward.1} parent=1 // pred_check
      _
    $region19: #{siren_fcn_forward.1} parent=1 // pred_check_branch
      %33 = sbr.rel (0) target = $region21
    $region20: #{siren_fcn_forward.1} parent=1 // pred_region
      _
    $region21: #{siren_fcn_forward.1} parent=1 // pred_fallthru
      _
    // Predicated region
    $region22: #{siren_fcn_forward.1} parent=1 // pred_check
      _
    $region23: #{siren_fcn_forward.1} parent=1 // pred_check_branch
      %35 = sbr.rel (0) target = $region25
    $region24: #{siren_fcn_forward.1} parent=1 // pred_region
      %s37 = ssub.s32 2048, 2048
      %38 = vsyncadd [#allocation5], %s37
      %s39 = sshll.u32 [#allocation4], 4
      %s40 = int_to_ptr.vmem [resolvable:$true] %s39
      %45 = dma.hbm_to_vmem [thread:$0]  %s5, 2048, %s40, [#allocation5], 128, 128, 8
    $region25: #{siren_fcn_forward.1} parent=1 // pred_fallthru
      _
    // Predicated region
    $region26: #{siren_fcn_forward.1} parent=1 // pred_check
      _
    $region27: #{siren_fcn_forward.1} parent=1 // pred_check_branch
      %47 = sbr.rel (0) target = $region29
    $region28: #{siren_fcn_forward.1} parent=1 // pred_region
      _
    $region29: #{siren_fcn_forward.1} parent=1 // pred_fallthru
      _
    // Predicated region
    $region30: #{siren_fcn_forward.1} parent=1 // pred_check
      _
    $region31: #{siren_fcn_forward.1} parent=1 // pred_check_branch
      %49 = sbr.rel (0) target = $region33
    $region32: #{siren_fcn_forward.1} parent=1 // pred_region
      %50 = dma.done [#allocation3], 6144
    $region33: #{siren_fcn_forward.1} parent=1 // pred_fallthru
      _
    // Predicated region
    $region34: #{siren_fcn_forward.1} parent=1 // pred_check
      _
    $region35: #{siren_fcn_forward.1} parent=1 // pred_check_branch
      %52 = sbr.rel (0) target = $region37
    $region36: #{siren_fcn_forward.1} parent=1 // pred_region
      %53 = dma.done [#allocation5], 2048
    $region37: #{siren_fcn_forward.1} parent=1 // pred_fallthru
      _
    %v54 = vld [vmem:[%s0] sm:$0xff]
    %v55 = vld [vmem:[%s0 + $0x8] sm:$0xff]
    %v56 = vld [vmem:[%s0 + $0x10] sm:$0xff]
    %v57 = vld [vmem:[%s0 + $0x18] sm:$0xff]
    %v58 = vrot.slane %v54, 7
    %v59 = vrot.slane %v55, 7
    %v60 = vrot.slane %v56, 7
    %v61 = vrot.slane %v57, 7
    %v62 = vlaneseq
    %v63 = vshrl.u32 %v62, 7
    %vm64 = vcmp.lt.s32.totalorder %v63, 1
    %v65 = vsel %vm64, %v60, %v61
    %v66 = vsel %vm64, %v59, %v60
    %v67 = vsel %vm64, %v58, %v59
    %v68 = vsel %vm64, %v61, %v58
    %v69 = vadd.s32 %v63, 8
    %v70 = vadd.s32 %v63, 16
    %v71 = vadd.s32 %v63, 24
    %vm72 = vcmp.lt.s32.totalorder %v63, 0
    %v73 = vsub.s32 0, %v63
    %v74 = vsel %vm72, %v73, %v63
    %v75 = vshrl.u32 %v74, 4
    %v76 = vand.u32 %v74, 15
    %v77 = vsub.s32 0, %v76
    %v78 = vsel %vm72, %v77, %v76
    %vm79 = vcmp.lt.s32.totalorder %v69, 0
    %v80 = vsub.s32 0, %v69
    %v81 = vsel %vm79, %v80, %v69
    %v82 = vshrl.u32 %v81, 4
    %v83 = vand.u32 %v81, 15
    %v84 = vsub.s32 0, %v83
    %v85 = vsel %vm79, %v84, %v83
    %vm86 = vcmp.lt.s32.totalorder %v70, 0
    %v87 = vsub.s32 0, %v70
    %v88 = vsel %vm86, %v87, %v70
    %v89 = vshrl.u32 %v88, 4
    %v90 = vand.u32 %v88, 15
    %v91 = vsub.s32 0, %v90
    %v92 = vsel %vm86, %v91, %v90
    %vm93 = vcmp.lt.s32.totalorder %v71, 0
    %v94 = vsub.s32 0, %v71
    %v95 = vsel %vm93, %v94, %v71
    %v96 = vshrl.u32 %v95, 4
    %v97 = vand.u32 %v95, 15
    %v98 = vsub.s32 0, %v97
    %v99 = vsel %vm93, %v98, %v97
    %vm100 = vcmp.ne.s32.totalorder %v78, 0
    %vm101 = vcmp.ne.s32.totalorder %v85, 0
    %vm102 = vcmp.ne.s32.totalorder %v92, 0
    %vm103 = vcmp.ne.s32.totalorder %v99, 0
    %vm104 = vcmp.lt.s32.totalorder %v78, 0
    %vm105 = vcmp.lt.s32.totalorder %v85, 0
    %vm106 = vcmp.lt.s32.totalorder %v92, 0
    %vm107 = vcmp.lt.s32.totalorder %v99, 0
    %vm108 = vmand %vm104, %vm100
    %vm109 = vmand %vm105, %vm101
    %vm110 = vmand %vm106, %vm102
    %vm111 = vmand %vm107, %vm103
    %v112 = vadd.s32 %v78, 16
    %v113 = vadd.s32 %v85, 16
    %v114 = vadd.s32 %v92, 16
    %v115 = vadd.s32 %v99, 16
    %v116 = vsel %vm108, %v112, %v78
    %v117 = vsel %vm109, %v113, %v85
    %v118 = vsel %vm110, %v114, %v92
    %v119 = vsel %vm111, %v115, %v99
    %vm120 = vcmp.ne.s32.totalorder %v116, 0
    %vm121 = vcmp.ne.s32.totalorder %v117, 0
    %vm122 = vcmp.ne.s32.totalorder %v118, 0
    %vm123 = vcmp.ne.s32.totalorder %v119, 0
    %v124 = vsel %vm120, %v68, 0.0
    %v125 = vsel %vm121, %v67, 0.0
    %v126 = vsel %vm122, %v66, 0.0
    %v127 = vsel %vm123, %v65, 0.0
    %v128 = vrot.slane %v54, 1
    %v129 = vrot.slane %v55, 1
    %v130 = vrot.slane %v56, 1
    %v131 = vrot.slane %v57, 1
    %vm132 = vcmp.lt.s32.totalorder %v63, 7
    %v133 = vsel %vm132, %v130, %v131
    %v134 = vsel %vm132, %v129, %v130
    %v135 = vsel %vm132, %v128, %v129
    %v136 = vsel %vm132, %v131, %v128
    %vm137 = vcmp.ne.s32.totalorder %v116, 15
    %vm138 = vcmp.ne.s32.totalorder %v117, 15
    %vm139 = vcmp.ne.s32.totalorder %v118, 15
    %vm140 = vcmp.ne.s32.totalorder %v119, 15
    %v141 = vsel %vm137, %v135, 0.0
    %v142 = vsel %vm138, %v134, 0.0
    %v143 = vsel %vm139, %v133, 0.0
    %v144 = vsel %vm140, %v136, 0.0
    %v145 = vld [vmem:[%s1] sm:$0xff]
    %v146 = vld [vmem:[%s1 + $0x8] sm:$0xff]
    %v147 = vld [vmem:[%s1 + $0x10] sm:$0xff]
    %v148 = vld [vmem:[%s1 + $0x18] sm:$0xff]
    %v149 = vld [vmem:[%s1 + $0x20] sm:$0xff]
    %v150 = vld [vmem:[%s1 + $0x28] sm:$0xff]
    %v151 = vld [vmem:[%s1 + $0x30] sm:$0xff]
    %v152 = vld [vmem:[%s1 + $0x38] sm:$0xff]
    %v153 = vld [vmem:[%s1 + $0x40] sm:$0xff]
    %v154 = vld [vmem:[%s1 + $0x48] sm:$0xff]
    %v155 = vld [vmem:[%s1 + $0x50] sm:$0xff]
    %v156 = vld [vmem:[%s1 + $0x58] sm:$0xff]
    %v157 = vld [vmem:[%s1 + $0x60] sm:$0xff]
    %v158 = vld [vmem:[%s1 + $0x68] sm:$0xff]
    %v159 = vld [vmem:[%s1 + $0x70] sm:$0xff]
    %v160 = vld [vmem:[%s1 + $0x78] sm:$0xff]
    %v161 = vld [vmem:[%s1 + $0x80] sm:$0xff]
    %v162 = vld [vmem:[%s1 + $0x88] sm:$0xff]
    %v163 = vld [vmem:[%s1 + $0x90] sm:$0xff]
    %v164 = vld [vmem:[%s1 + $0x98] sm:$0xff]
    %v165 = vld [vmem:[%s1 + $0xa0] sm:$0xff]
    %v166 = vld [vmem:[%s1 + $0xa8] sm:$0xff]
    %v167 = vld [vmem:[%s1 + $0xb0] sm:$0xff]
    %v168 = vld [vmem:[%s1 + $0xb8] sm:$0xff]
    %v169 = vld [vmem:[%s1 + $0xc0] sm:$0xff]
    %v170 = vld [vmem:[%s1 + $0xc8] sm:$0xff]
    %v171 = vld [vmem:[%s1 + $0xd0] sm:$0xff]
    %v172 = vld [vmem:[%s1 + $0xd8] sm:$0xff]
    %v173 = vld [vmem:[%s1 + $0xe0] sm:$0xff]
    %v174 = vld [vmem:[%s1 + $0xe8] sm:$0xff]
    %v175 = vld [vmem:[%s1 + $0xf0] sm:$0xff]
    %v176 = vld [vmem:[%s1 + $0xf8] sm:$0xff]
    %v177 = vld [vmem:[%s1 + $0x100] sm:$0xff]
    %v178 = vld [vmem:[%s1 + $0x108] sm:$0xff]
    %v179 = vld [vmem:[%s1 + $0x110] sm:$0xff]
    %v180 = vld [vmem:[%s1 + $0x118] sm:$0xff]
    %v181 = vld [vmem:[%s1 + $0x120] sm:$0xff]
    %v182 = vld [vmem:[%s1 + $0x128] sm:$0xff]
    %v183 = vld [vmem:[%s1 + $0x130] sm:$0xff]
    %v184 = vld [vmem:[%s1 + $0x138] sm:$0xff]
    %v185 = vld [vmem:[%s1 + $0x140] sm:$0xff]
    %v186 = vld [vmem:[%s1 + $0x148] sm:$0xff]
    %v187 = vld [vmem:[%s1 + $0x150] sm:$0xff]
    %v188 = vld [vmem:[%s1 + $0x158] sm:$0xff]
    %v189 = vld [vmem:[%s1 + $0x160] sm:$0xff]
    %v190 = vld [vmem:[%s1 + $0x168] sm:$0xff]
    %v191 = vld [vmem:[%s1 + $0x170] sm:$0xff]
    %v192 = vld [vmem:[%s1 + $0x178] sm:$0xff]
    %v193 = vld [vmem:[%s2] sm:$0x1]
    %v195 = vlaneseq
    %v196 = vshrl.u32 %v195, 7
    %v197 = vsub.s32 0, %v196
    %v198 = vrot.slane %v193, %v197
    %200 = vmatprep.subr.mxu0 0.0
    %201 = vmatpush1.msra.mxu0 %v160
    %202 = vmatprep.subr.mxu0 0.0
    %203 = vmatpush1.msra.mxu0 %v159
    %204 = vmatprep.subr.mxu0 0.0
    %205 = vmatpush1.msra.mxu0 %v158
    %206 = vmatprep.subr.mxu0 0.0
    %207 = vmatpush1.msra.mxu0 %v157
    %208 = vmatprep.subr.mxu0 0.0
    %209 = vmatpush1.msra.mxu0 %v156
    %210 = vmatprep.subr.mxu0 0.0
    %211 = vmatpush1.msra.mxu0 %v155
    %212 = vmatprep.subr.mxu0 0.0
    %213 = vmatpush1.msra.mxu0 %v154
    %214 = vmatprep.subr.mxu0 0.0
    %215 = vmatpush1.msra.mxu0 %v153
    %216 = vmatprep.subr.mxu0 0.0
    %217 = vmatpush1.msra.mxu0 %v152
    %218 = vmatprep.subr.mxu0 0.0
    %219 = vmatpush1.msra.mxu0 %v151
    %220 = vmatprep.subr.mxu0 0.0
    %221 = vmatpush1.msra.mxu0 %v150
    %222 = vmatprep.subr.mxu0 0.0
    %223 = vmatpush1.msra.mxu0 %v149
    %224 = vmatprep.subr.mxu0 0.0
    %225 = vmatpush1.msra.mxu0 %v148
    %226 = vmatprep.subr.mxu0 0.0
    %227 = vmatpush1.msra.mxu0 %v147
    %228 = vmatprep.subr.mxu0 0.0
    %229 = vmatpush1.msra.mxu0 %v146
    %230 = vmatprep.subr.mxu0 0.0
    %231 = vmatpush1.msra.mxu0 %v145
    %232 = vmatprep.subr.mxu0 0.0
    %233 = vmatpush2.msra.mxu0 %v176
    %234 = vmatprep.subr.mxu0 0.0
    %235 = vmatpush2.msra.mxu0 %v175
    %236 = vmatprep.subr.mxu0 0.0
    %237 = vmatpush2.msra.mxu0 %v174
    %238 = vmatprep.subr.mxu0 0.0
    %239 = vmatpush2.msra.mxu0 %v173
    %240 = vmatprep.subr.mxu0 0.0
    %241 = vmatpush2.msra.mxu0 %v172
    %242 = vmatprep.subr.mxu0 0.0
    %243 = vmatpush2.msra.mxu0 %v171
    %244 = vmatprep.subr.mxu0 0.0
    %245 = vmatpush2.msra.mxu0 %v170
    %246 = vmatprep.subr.mxu0 0.0
    %247 = vmatpush2.msra.mxu0 %v169
    %248 = vmatprep.subr.mxu0 0.0
    %249 = vmatpush2.msra.mxu0 %v168
    %250 = vmatprep.subr.mxu0 0.0
    %251 = vmatpush2.msra.mxu0 %v167
    %252 = vmatprep.subr.mxu0 0.0
    %253 = vmatpush2.msra.mxu0 %v166
    %254 = vmatprep.subr.mxu0 0.0
    %255 = vmatpush2.msra.mxu0 %v165
    %256 = vmatprep.subr.mxu0 0.0
    %257 = vmatpush2.msra.mxu0 %v164
    %258 = vmatprep.subr.mxu0 0.0
    %259 = vmatpush2.msra.mxu0 %v163
    %260 = vmatprep.subr.mxu0 0.0
    %261 = vmatpush2.msra.mxu0 %v162
    %262 = vmatprep.subr.mxu0 0.0
    %263 = vmatpush2.msra.mxu0 %v161
    %264 = vmatprep.mubr.f32.mxu0 %v54
    %265 = vmatmul.mubr.f32.gmra.mxu0 %v124
    %v266 = vpop.f32.mrf.mxu0
    %v267 = vadd.f32 %v198, %v266
    %v268 = vpop.f32.mrf.mxu0
    %269 = vmatprep.mubr.f32.mxu0 %v55
    %270 = vmatmul.mubr.f32.gmra.mxu0 %v125
    %v271 = vpop.f32.mrf.mxu0
    %v272 = vadd.f32 %v198, %v271
    %v273 = vpop.f32.mrf.mxu0
    %274 = vmatprep.mubr.f32.mxu0 %v56
    %275 = vmatmul.mubr.f32.gmra.mxu0 %v126
    %v276 = vpop.f32.mrf.mxu0
    %v277 = vadd.f32 %v198, %v276
    %v278 = vpop.f32.mrf.mxu0
    %279 = vmatprep.mubr.f32.mxu0 %v57
    %280 = vmatmul.mubr.f32.gmra.mxu0 %v127
    %v281 = vpop.f32.mrf.mxu0
    %v282 = vadd.f32 %v198, %v281
    %v283 = vpop.f32.mrf.mxu0
    %284 = vdwg.mxu0
    %285 = vmatprep.subr.mxu0 0.0
    %286 = vmatpush1.msra.mxu0 %v192
    %287 = vmatprep.subr.mxu0 0.0
    %288 = vmatpush1.msra.mxu0 %v191
    %289 = vmatprep.subr.mxu0 0.0
    %290 = vmatpush1.msra.mxu0 %v190
    %291 = vmatprep.subr.mxu0 0.0
    %292 = vmatpush1.msra.mxu0 %v189
    %293 = vmatprep.subr.mxu0 0.0
    %294 = vmatpush1.msra.mxu0 %v188
    %295 = vmatprep.subr.mxu0 0.0
    %296 = vmatpush1.msra.mxu0 %v187
    %297 = vmatprep.subr.mxu0 0.0
    %298 = vmatpush1.msra.mxu0 %v186
    %299 = vmatprep.subr.mxu0 0.0
    %300 = vmatpush1.msra.mxu0 %v185
    %301 = vmatprep.subr.mxu0 0.0
    %302 = vmatpush1.msra.mxu0 %v184
    %303 = vmatprep.subr.mxu0 0.0
    %304 = vmatpush1.msra.mxu0 %v183
    %305 = vmatprep.subr.mxu0 0.0
    %306 = vmatpush1.msra.mxu0 %v182
    %307 = vmatprep.subr.mxu0 0.0
    %308 = vmatpush1.msra.mxu0 %v181
    %309 = vmatprep.subr.mxu0 0.0
    %310 = vmatpush1.msra.mxu0 %v180
    %311 = vmatprep.subr.mxu0 0.0
    %312 = vmatpush1.msra.mxu0 %v179
    %313 = vmatprep.subr.mxu0 0.0
    %314 = vmatpush1.msra.mxu0 %v178
    %315 = vmatprep.subr.mxu0 0.0
    %316 = vmatpush1.msra.mxu0 %v177
    %317 = vmatprep.subr.mxu0 0.0
    %318 = vmatpush2.msra.mxu0 0.0
    %319 = vmatprep.subr.mxu0 0.0
    %320 = vmatpush2.msra.mxu0 0.0
    %321 = vmatprep.subr.mxu0 0.0
    %322 = vmatpush2.msra.mxu0 0.0
    %323 = vmatprep.subr.mxu0 0.0
    %324 = vmatpush2.msra.mxu0 0.0
    %325 = vmatprep.subr.mxu0 0.0
    %326 = vmatpush2.msra.mxu0 0.0
    %327 = vmatprep.subr.mxu0 0.0
    %328 = vmatpush2.msra.mxu0 0.0
    %329 = vmatprep.subr.mxu0 0.0
    %330 = vmatpush2.msra.mxu0 0.0
    %331 = vmatprep.subr.mxu0 0.0
    %332 = vmatpush2.msra.mxu0 0.0
    %333 = vmatprep.subr.mxu0 0.0
    %334 = vmatpush2.msra.mxu0 0.0
    %335 = vmatprep.subr.mxu0 0.0
    %336 = vmatpush2.msra.mxu0 0.0
    %337 = vmatprep.subr.mxu0 0.0
    %338 = vmatpush2.msra.mxu0 0.0
    %339 = vmatprep.subr.mxu0 0.0
    %340 = vmatpush2.msra.mxu0 0.0
    %341 = vmatprep.subr.mxu0 0.0
    %342 = vmatpush2.msra.mxu0 0.0
    %343 = vmatprep.subr.mxu0 0.0
    %344 = vmatpush2.msra.mxu0 0.0
    %345 = vmatprep.subr.mxu0 0.0
    %346 = vmatpush2.msra.mxu0 0.0
    %347 = vmatprep.subr.mxu0 0.0
    %348 = vmatpush2.msra.mxu0 0.0
    %349 = vmatprep.mubr.f32.mxu0 0.0
    %350 = vmatmul.mubr.f32.gmra.mxu0 %v141
    %v351 = vpop.f32.mrf.mxu0
    %v352 = vadd.f32 %v267, %v351
    %v353 = vpop.f32.mrf.mxu0
    %354 = vmatprep.mubr.f32.mxu0 0.0
    %355 = vmatmul.mubr.f32.gmra.mxu0 %v142
    %v356 = vpop.f32.mrf.mxu0
    %v357 = vadd.f32 %v272, %v356
    %v358 = vpop.f32.mrf.mxu0
    %359 = vmatprep.mubr.f32.mxu0 0.0
    %360 = vmatmul.mubr.f32.gmra.mxu0 %v143
    %v361 = vpop.f32.mrf.mxu0
    %v362 = vadd.f32 %v277, %v361
    %v363 = vpop.f32.mrf.mxu0
    %364 = vmatprep.mubr.f32.mxu0 0.0
    %365 = vmatmul.mubr.f32.gmra.mxu0 %v144
    %v366 = vpop.f32.mrf.mxu0
    %v367 = vadd.f32 %v282, %v366
    %v368 = vpop.f32.mrf.mxu0
    %369 = vdwg.mxu0
    %v370 = vmax.f32 %v352, 0.0
    %v371 = vmax.f32 %v357, 0.0
    %v372 = vmax.f32 %v362, 0.0
    %v373 = vmax.f32 %v367, 0.0
    %v374 = vrot.slane %v370, 7
    %v375 = vrot.slane %v371, 7
    %v376 = vrot.slane %v372, 7
    %v377 = vrot.slane %v373, 7
    %v378 = vsel %vm64, %v376, %v377
    %v379 = vsel %vm64, %v375, %v376
    %v380 = vsel %vm64, %v374, %v375
    %v381 = vsel %vm64, %v377, %v374
    %v382 = vsel %vm120, %v381, 0.0
    %v383 = vsel %vm121, %v380, 0.0
    %v384 = vsel %vm122, %v379, 0.0
    %v385 = vsel %vm123, %v378, 0.0
    %v386 = vrot.slane %v370, 1
    %v387 = vrot.slane %v371, 1
    %v388 = vrot.slane %v372, 1
    %v389 = vrot.slane %v373, 1
    %v390 = vsel %vm132, %v388, %v389
    %v391 = vsel %vm132, %v387, %v388
    %v392 = vsel %vm132, %v386, %v387
    %v393 = vsel %vm132, %v389, %v386
    %v394 = vsel %vm137, %v392, 0.0
    %v395 = vsel %vm138, %v391, 0.0
    %v396 = vsel %vm139, %v390, 0.0
    %v397 = vsel %vm140, %v393, 0.0
    %v398 = vld [vmem:[#allocation2] sm:$0xff]
    %v399 = vld [vmem:[#allocation2 + $0x8] sm:$0xff]
    %v400 = vld [vmem:[#allocation2 + $0x10] sm:$0xff]
    %v401 = vld [vmem:[#allocation2 + $0x18] sm:$0xff]
    %v402 = vld [vmem:[#allocation2 + $0x20] sm:$0xff]
    %v403 = vld [vmem:[#allocation2 + $0x28] sm:$0xff]
    %v404 = vld [vmem:[#allocation2 + $0x30] sm:$0xff]
    %v405 = vld [vmem:[#allocation2 + $0x38] sm:$0xff]
    %v406 = vld [vmem:[#allocation2 + $0x40] sm:$0xff]
    %v407 = vld [vmem:[#allocation2 + $0x48] sm:$0xff]
    %v408 = vld [vmem:[#allocation2 + $0x50] sm:$0xff]
    %v409 = vld [vmem:[#allocation2 + $0x58] sm:$0xff]
    %v410 = vld [vmem:[#allocation2 + $0x60] sm:$0xff]
    %v411 = vld [vmem:[#allocation2 + $0x68] sm:$0xff]
    %v412 = vld [vmem:[#allocation2 + $0x70] sm:$0xff]
    %v413 = vld [vmem:[#allocation2 + $0x78] sm:$0xff]
    %v414 = vld [vmem:[#allocation2 + $0x80] sm:$0xff]
    %v415 = vld [vmem:[#allocation2 + $0x88] sm:$0xff]
    %v416 = vld [vmem:[#allocation2 + $0x90] sm:$0xff]
    %v417 = vld [vmem:[#allocation2 + $0x98] sm:$0xff]
    %v418 = vld [vmem:[#allocation2 + $0xa0] sm:$0xff]
    %v419 = vld [vmem:[#allocation2 + $0xa8] sm:$0xff]
    %v420 = vld [vmem:[#allocation2 + $0xb0] sm:$0xff]
    %v421 = vld [vmem:[#allocation2 + $0xb8] sm:$0xff]
    %v422 = vld [vmem:[#allocation2 + $0xc0] sm:$0xff]
    %v423 = vld [vmem:[#allocation2 + $0xc8] sm:$0xff]
    %v424 = vld [vmem:[#allocation2 + $0xd0] sm:$0xff]
    %v425 = vld [vmem:[#allocation2 + $0xd8] sm:$0xff]
    %v426 = vld [vmem:[#allocation2 + $0xe0] sm:$0xff]
    %v427 = vld [vmem:[#allocation2 + $0xe8] sm:$0xff]
    %v428 = vld [vmem:[#allocation2 + $0xf0] sm:$0xff]
    %v429 = vld [vmem:[#allocation2 + $0xf8] sm:$0xff]
    %v430 = vld [vmem:[#allocation2 + $0x100] sm:$0xff]
    %v431 = vld [vmem:[#allocation2 + $0x108] sm:$0xff]
    %v432 = vld [vmem:[#allocation2 + $0x110] sm:$0xff]
    %v433 = vld [vmem:[#allocation2 + $0x118] sm:$0xff]
    %v434 = vld [vmem:[#allocation2 + $0x120] sm:$0xff]
    %v435 = vld [vmem:[#allocation2 + $0x128] sm:$0xff]
    %v436 = vld [vmem:[#allocation2 + $0x130] sm:$0xff]
    %v437 = vld [vmem:[#allocation2 + $0x138] sm:$0xff]
    %v438 = vld [vmem:[#allocation2 + $0x140] sm:$0xff]
    %v439 = vld [vmem:[#allocation2 + $0x148] sm:$0xff]
    %v440 = vld [vmem:[#allocation2 + $0x150] sm:$0xff]
    %v441 = vld [vmem:[#allocation2 + $0x158] sm:$0xff]
    %v442 = vld [vmem:[#allocation2 + $0x160] sm:$0xff]
    %v443 = vld [vmem:[#allocation2 + $0x168] sm:$0xff]
    %v444 = vld [vmem:[#allocation2 + $0x170] sm:$0xff]
    %v445 = vld [vmem:[#allocation2 + $0x178] sm:$0xff]
    %v446 = vld [vmem:[%s4] sm:$0x1]
    %v448 = vlaneseq
    %v449 = vshrl.u32 %v448, 7
    %v450 = vsub.s32 0, %v449
    %v451 = vrot.slane %v446, %v450
    %453 = vmatprep.subr.mxu0 0.0
    %454 = vmatpush1.msra.mxu0 %v413
    %455 = vmatprep.subr.mxu0 0.0
    %456 = vmatpush1.msra.mxu0 %v412
    %457 = vmatprep.subr.mxu0 0.0
    %458 = vmatpush1.msra.mxu0 %v411
    %459 = vmatprep.subr.mxu0 0.0
    %460 = vmatpush1.msra.mxu0 %v410
    %461 = vmatprep.subr.mxu0 0.0
    %462 = vmatpush1.msra.mxu0 %v409
    %463 = vmatprep.subr.mxu0 0.0
    %464 = vmatpush1.msra.mxu0 %v408
    %465 = vmatprep.subr.mxu0 0.0
    %466 = vmatpush1.msra.mxu0 %v407
    %467 = vmatprep.subr.mxu0 0.0
    %468 = vmatpush1.msra.mxu0 %v406
    %469 = vmatprep.subr.mxu0 0.0
    %470 = vmatpush1.msra.mxu0 %v405
    %471 = vmatprep.subr.mxu0 0.0
    %472 = vmatpush1.msra.mxu0 %v404
    %473 = vmatprep.subr.mxu0 0.0
    %474 = vmatpush1.msra.mxu0 %v403
    %475 = vmatprep.subr.mxu0 0.0
    %476 = vmatpush1.msra.mxu0 %v402
    %477 = vmatprep.subr.mxu0 0.0
    %478 = vmatpush1.msra.mxu0 %v401
    %479 = vmatprep.subr.mxu0 0.0
    %480 = vmatpush1.msra.mxu0 %v400
    %481 = vmatprep.subr.mxu0 0.0
    %482 = vmatpush1.msra.mxu0 %v399
    %483 = vmatprep.subr.mxu0 0.0
    %484 = vmatpush1.msra.mxu0 %v398
    %485 = vmatprep.subr.mxu0 0.0
    %486 = vmatpush2.msra.mxu0 %v429
    %487 = vmatprep.subr.mxu0 0.0
    %488 = vmatpush2.msra.mxu0 %v428
    %489 = vmatprep.subr.mxu0 0.0
    %490 = vmatpush2.msra.mxu0 %v427
    %491 = vmatprep.subr.mxu0 0.0
    %492 = vmatpush2.msra.mxu0 %v426
    %493 = vmatprep.subr.mxu0 0.0
    %494 = vmatpush2.msra.mxu0 %v425
    %495 = vmatprep.subr.mxu0 0.0
    %496 = vmatpush2.msra.mxu0 %v424
    %497 = vmatprep.subr.mxu0 0.0
    %498 = vmatpush2.msra.mxu0 %v423
    %499 = vmatprep.subr.mxu0 0.0
    %500 = vmatpush2.msra.mxu0 %v422
    %501 = vmatprep.subr.mxu0 0.0
    %502 = vmatpush2.msra.mxu0 %v421
    %503 = vmatprep.subr.mxu0 0.0
    %504 = vmatpush2.msra.mxu0 %v420
    %505 = vmatprep.subr.mxu0 0.0
    %506 = vmatpush2.msra.mxu0 %v419
    %507 = vmatprep.subr.mxu0 0.0
    %508 = vmatpush2.msra.mxu0 %v418
    %509 = vmatprep.subr.mxu0 0.0
    %510 = vmatpush2.msra.mxu0 %v417
    %511 = vmatprep.subr.mxu0 0.0
    %512 = vmatpush2.msra.mxu0 %v416
    %513 = vmatprep.subr.mxu0 0.0
    %514 = vmatpush2.msra.mxu0 %v415
    %515 = vmatprep.subr.mxu0 0.0
    %516 = vmatpush2.msra.mxu0 %v414
    %517 = vmatprep.mubr.f32.mxu0 %v370
    %518 = vmatmul.mubr.f32.gmra.mxu0 %v382
    %v519 = vpop.f32.mrf.mxu0
    %v520 = vadd.f32 %v451, %v519
    %v521 = vpop.f32.mrf.mxu0
    %522 = vmatprep.mubr.f32.mxu0 %v371
    %523 = vmatmul.mubr.f32.gmra.mxu0 %v383
    %v524 = vpop.f32.mrf.mxu0
    %v525 = vadd.f32 %v451, %v524
    %v526 = vpop.f32.mrf.mxu0
    %527 = vmatprep.mubr.f32.mxu0 %v372
    %528 = vmatmul.mubr.f32.gmra.mxu0 %v384
    %v529 = vpop.f32.mrf.mxu0
    %v530 = vadd.f32 %v451, %v529
    %v531 = vpop.f32.mrf.mxu0
    %532 = vmatprep.mubr.f32.mxu0 %v373
    %533 = vmatmul.mubr.f32.gmra.mxu0 %v385
    %v534 = vpop.f32.mrf.mxu0
    %v535 = vadd.f32 %v451, %v534
    %v536 = vpop.f32.mrf.mxu0
    %537 = vdwg.mxu0
    %538 = vmatprep.subr.mxu0 0.0
    %539 = vmatpush1.msra.mxu0 %v445
    %540 = vmatprep.subr.mxu0 0.0
    %541 = vmatpush1.msra.mxu0 %v444
    %542 = vmatprep.subr.mxu0 0.0
    %543 = vmatpush1.msra.mxu0 %v443
    %544 = vmatprep.subr.mxu0 0.0
    %545 = vmatpush1.msra.mxu0 %v442
    %546 = vmatprep.subr.mxu0 0.0
    %547 = vmatpush1.msra.mxu0 %v441
    %548 = vmatprep.subr.mxu0 0.0
    %549 = vmatpush1.msra.mxu0 %v440
    %550 = vmatprep.subr.mxu0 0.0
    %551 = vmatpush1.msra.mxu0 %v439
    %552 = vmatprep.subr.mxu0 0.0
    %553 = vmatpush1.msra.mxu0 %v438
    %554 = vmatprep.subr.mxu0 0.0
    %555 = vmatpush1.msra.mxu0 %v437
    %556 = vmatprep.subr.mxu0 0.0
    %557 = vmatpush1.msra.mxu0 %v436
    %558 = vmatprep.subr.mxu0 0.0
    %559 = vmatpush1.msra.mxu0 %v435
    %560 = vmatprep.subr.mxu0 0.0
    %561 = vmatpush1.msra.mxu0 %v434
    %562 = vmatprep.subr.mxu0 0.0
    %563 = vmatpush1.msra.mxu0 %v433
    %564 = vmatprep.subr.mxu0 0.0
    %565 = vmatpush1.msra.mxu0 %v432
    %566 = vmatprep.subr.mxu0 0.0
    %567 = vmatpush1.msra.mxu0 %v431
    %568 = vmatprep.subr.mxu0 0.0
    %569 = vmatpush1.msra.mxu0 %v430
    %570 = vmatprep.subr.mxu0 0.0
    %571 = vmatpush2.msra.mxu0 0.0
    %572 = vmatprep.subr.mxu0 0.0
    %573 = vmatpush2.msra.mxu0 0.0
    %574 = vmatprep.subr.mxu0 0.0
    %575 = vmatpush2.msra.mxu0 0.0
    %576 = vmatprep.subr.mxu0 0.0
    %577 = vmatpush2.msra.mxu0 0.0
    %578 = vmatprep.subr.mxu0 0.0
    %579 = vmatpush2.msra.mxu0 0.0
    %580 = vmatprep.subr.mxu0 0.0
    %581 = vmatpush2.msra.mxu0 0.0
    %582 = vmatprep.subr.mxu0 0.0
    %583 = vmatpush2.msra.mxu0 0.0
    %584 = vmatprep.subr.mxu0 0.0
    %585 = vmatpush2.msra.mxu0 0.0
    %586 = vmatprep.subr.mxu0 0.0
    %587 = vmatpush2.msra.mxu0 0.0
    %588 = vmatprep.subr.mxu0 0.0
    %589 = vmatpush2.msra.mxu0 0.0
    %590 = vmatprep.subr.mxu0 0.0
    %591 = vmatpush2.msra.mxu0 0.0
    %592 = vmatprep.subr.mxu0 0.0
    %593 = vmatpush2.msra.mxu0 0.0
    %594 = vmatprep.subr.mxu0 0.0
    %595 = vmatpush2.msra.mxu0 0.0
    %596 = vmatprep.subr.mxu0 0.0
    %597 = vmatpush2.msra.mxu0 0.0
    %598 = vmatprep.subr.mxu0 0.0
    %599 = vmatpush2.msra.mxu0 0.0
    %600 = vmatprep.subr.mxu0 0.0
    %601 = vmatpush2.msra.mxu0 0.0
    %602 = vmatprep.mubr.f32.mxu0 0.0
    %603 = vmatmul.mubr.f32.gmra.mxu0 %v394
    %v604 = vpop.f32.mrf.mxu0
    %v605 = vadd.f32 %v520, %v604
    %v606 = vpop.f32.mrf.mxu0
    %607 = vmatprep.mubr.f32.mxu0 0.0
    %608 = vmatmul.mubr.f32.gmra.mxu0 %v395
    %v609 = vpop.f32.mrf.mxu0
    %v610 = vadd.f32 %v525, %v609
    %v611 = vpop.f32.mrf.mxu0
    %612 = vmatprep.mubr.f32.mxu0 0.0
    %613 = vmatmul.mubr.f32.gmra.mxu0 %v396
    %v614 = vpop.f32.mrf.mxu0
    %v615 = vadd.f32 %v530, %v614
    %v616 = vpop.f32.mrf.mxu0
    %617 = vmatprep.mubr.f32.mxu0 0.0
    %618 = vmatmul.mubr.f32.gmra.mxu0 %v397
    %v619 = vpop.f32.mrf.mxu0
    %v620 = vadd.f32 %v535, %v619
    %v621 = vpop.f32.mrf.mxu0
    %622 = vdwg.mxu0
    %v623 = vmax.f32 %v605, 0.0
    %v624 = vmax.f32 %v610, 0.0
    %v625 = vmax.f32 %v615, 0.0
    %v626 = vmax.f32 %v620, 0.0
    %v627 = vld [vmem:[#allocation4] sm:$0xff]
    %v628 = vld [vmem:[#allocation4 + $0x8] sm:$0xff]
    %v629 = vld [vmem:[#allocation4 + $0x10] sm:$0xff]
    %v630 = vld [vmem:[#allocation4 + $0x18] sm:$0xff]
    %v631 = vld [vmem:[#allocation4 + $0x20] sm:$0xff]
    %v632 = vld [vmem:[#allocation4 + $0x28] sm:$0xff]
    %v633 = vld [vmem:[#allocation4 + $0x30] sm:$0xff]
    %v634 = vld [vmem:[#allocation4 + $0x38] sm:$0xff]
    %v635 = vld [vmem:[#allocation4 + $0x40] sm:$0xff]
    %v636 = vld [vmem:[#allocation4 + $0x48] sm:$0xff]
    %v637 = vld [vmem:[#allocation4 + $0x50] sm:$0xff]
    %v638 = vld [vmem:[#allocation4 + $0x58] sm:$0xff]
    %v639 = vld [vmem:[#allocation4 + $0x60] sm:$0xff]
    %v640 = vld [vmem:[#allocation4 + $0x68] sm:$0xff]
    %v641 = vld [vmem:[#allocation4 + $0x70] sm:$0xff]
    %v642 = vld [vmem:[#allocation4 + $0x78] sm:$0xff]
    %v643 = vld [vmem:[%s6] sm:$0x1]
    %v645 = vlaneseq
    %v646 = vshrl.u32 %v645, 7
    %v647 = vsub.s32 0, %v646
    %v648 = vrot.slane %v643, %v647
    %650 = vmatprep.subr.mxu0 0.0
    %651 = vmatpush1.msra.mxu0 %v642
    %652 = vmatprep.subr.mxu0 0.0
    %653 = vmatpush1.msra.mxu0 %v641
    %654 = vmatprep.subr.mxu0 0.0
    %655 = vmatpush1.msra.mxu0 %v640
    %656 = vmatprep.subr.mxu0 0.0
    %657 = vmatpush1.msra.mxu0 %v639
    %658 = vmatprep.subr.mxu0 0.0
    %659 = vmatpush1.msra.mxu0 %v638
    %660 = vmatprep.subr.mxu0 0.0
    %661 = vmatpush1.msra.mxu0 %v637
    %662 = vmatprep.subr.mxu0 0.0
    %663 = vmatpush1.msra.mxu0 %v636
    %664 = vmatprep.subr.mxu0 0.0
    %665 = vmatpush1.msra.mxu0 %v635
    %666 = vmatprep.subr.mxu0 0.0
    %667 = vmatpush1.msra.mxu0 %v634
    %668 = vmatprep.subr.mxu0 0.0
    %669 = vmatpush1.msra.mxu0 %v633
    %670 = vmatprep.subr.mxu0 0.0
    %671 = vmatpush1.msra.mxu0 %v632
    %672 = vmatprep.subr.mxu0 0.0
    %673 = vmatpush1.msra.mxu0 %v631
    %674 = vmatprep.subr.mxu0 0.0
    %675 = vmatpush1.msra.mxu0 %v630
    %676 = vmatprep.subr.mxu0 0.0
    %677 = vmatpush1.msra.mxu0 %v629
    %678 = vmatprep.subr.mxu0 0.0
    %679 = vmatpush1.msra.mxu0 %v628
    %680 = vmatprep.subr.mxu0 0.0
    %681 = vmatpush1.msra.mxu0 %v627
    %682 = vmatprep.subr.mxu0 0.0
    %683 = vmatpush2.msra.mxu0 0.0
    %684 = vmatprep.subr.mxu0 0.0
    %685 = vmatpush2.msra.mxu0 0.0
    %686 = vmatprep.subr.mxu0 0.0
    %687 = vmatpush2.msra.mxu0 0.0
    %688 = vmatprep.subr.mxu0 0.0
    %689 = vmatpush2.msra.mxu0 0.0
    %690 = vmatprep.subr.mxu0 0.0
    %691 = vmatpush2.msra.mxu0 0.0
    %692 = vmatprep.subr.mxu0 0.0
    %693 = vmatpush2.msra.mxu0 0.0
    %694 = vmatprep.subr.mxu0 0.0
    %695 = vmatpush2.msra.mxu0 0.0
    %696 = vmatprep.subr.mxu0 0.0
    %697 = vmatpush2.msra.mxu0 0.0
    %698 = vmatprep.subr.mxu0 0.0
    %699 = vmatpush2.msra.mxu0 0.0
    %700 = vmatprep.subr.mxu0 0.0
    %701 = vmatpush2.msra.mxu0 0.0
    %702 = vmatprep.subr.mxu0 0.0
    %703 = vmatpush2.msra.mxu0 0.0
    %704 = vmatprep.subr.mxu0 0.0
    %705 = vmatpush2.msra.mxu0 0.0
    %706 = vmatprep.subr.mxu0 0.0
    %707 = vmatpush2.msra.mxu0 0.0
    %708 = vmatprep.subr.mxu0 0.0
    %709 = vmatpush2.msra.mxu0 0.0
    %710 = vmatprep.subr.mxu0 0.0
    %711 = vmatpush2.msra.mxu0 0.0
    %712 = vmatprep.subr.mxu0 0.0
    %713 = vmatpush2.msra.mxu0 0.0
    %714 = vmatprep.mubr.f32.mxu0 0.0
    %715 = vmatmul.mubr.f32.gmra.mxu0 %v623
    %v716 = vpop.f32.mrf.mxu0
    %v717 = vadd.f32 %v648, %v716
    %v718 = vpop.f32.mrf.mxu0
    %719 = vmatprep.mubr.f32.mxu0 0.0
    %720 = vmatmul.mubr.f32.gmra.mxu0 %v624
    %v721 = vpop.f32.mrf.mxu0
    %v722 = vadd.f32 %v648, %v721
    %v723 = vpop.f32.mrf.mxu0
    %724 = vmatprep.mubr.f32.mxu0 0.0
    %725 = vmatmul.mubr.f32.gmra.mxu0 %v625
    %v726 = vpop.f32.mrf.mxu0
    %v727 = vadd.f32 %v648, %v726
    %v728 = vpop.f32.mrf.mxu0
    %729 = vmatprep.mubr.f32.mxu0 0.0
    %730 = vmatmul.mubr.f32.gmra.mxu0 %v626
    %v731 = vpop.f32.mrf.mxu0
    %v732 = vadd.f32 %v648, %v731
    %v733 = vpop.f32.mrf.mxu0
    %734 = vdwg.mxu0
    %v735 = vand.u32 2147483647, %v717
    %vm736 = vcmp.le.f32.partialorder %v735, 0.7853982
    %vm737 = vcmp.lt.s32.totalorder %v717, 0
    %v738 = vand.u32 %v717, 2139095040
    %v739 = vshrl.u32 %v738, 23
    %v740 = vsub.s32 %v739, 127
    %v741 = vand.u32 2147483647, %v717
    %v742 = vand.u32 %v741, 8388607
    %v743 = vor.u32 %v742, 8388608
    %v744 = vsub.s32 0, %v743
    %v745 = vadd.s32 %v740, 1
    %vm746 = vcmp.gt.s32.totalorder %v745, 0
    %v747 = vsel %vm746, %v745, 0
    %v748 = vshrl.u32 %v747, 5
    %v749 = vand.u32 %v747, 31
    %v750 = vsub.s32 32, %v749
    %v751 = vshrl.u32 683565275, %v750
    %v752 = vshll.u32 683565275, %v749
    %v753 = vshrl.u32 2475754826, %v750
    %v754 = vor.u32 %v752, %v753
    %v755 = vshll.u32 2475754826, %v749
    %v756 = vshrl.u32 2131351028, %v750
    %v757 = vor.u32 %v755, %v756
    %v758 = vshll.u32 2131351028, %v749
    %v759 = vshrl.u32 2102212464, %v750
    %v760 = vor.u32 %v758, %v759
    %v761 = vshll.u32 2102212464, %v749
    %v762 = vshrl.u32 920167782, %v750
    %v763 = vor.u32 %v761, %v762
    %v764 = vshll.u32 920167782, %v749
    %v765 = vshrl.u32 1326507024, %v750
    %v766 = vor.u32 %v764, %v765
    %vm767 = vcmp.lt.s32.totalorder %v748, 1
    %vm768 = vcmp.lt.s32.totalorder %v748, 2
    %vm769 = vcmp.lt.s32.totalorder %v748, 3
    %vm770 = vcmp.lt.s32.totalorder %v748, 4
    %v771 = vsel %vm767, %v751, %v754
    %v772 = vsel %vm770, %v760, 2102212464
    %v773 = vsel %vm769, %v757, %v772
    %v774 = vsel %vm768, %v771, %v773
    %v775 = vsel %vm767, %v754, %v757
    %v776 = vsel %vm770, %v763, 920167782
    %v777 = vsel %vm769, %v760, %v776
    %v778 = vsel %vm768, %v775, %v777
    %v779 = vsel %vm767, %v757, %v760
    %v780 = vsel %vm770, %v766, 1326507024
    %v781 = vsel %vm769, %v763, %v780
    %v782 = vsel %vm768, %v779, %v781
    %v783 = vshll.u32 %v743, 8
    %v784 = vmul.u32.u64.compose %v783, %v782
    %v785 = vextract.low.u32 %v784
    %v786 = vextract.high.u32 %v784
    %v787 = vmul.u32.u64.compose %v783, %v778
    %v788 = vextract.low.u32 %v787
    %v789 = vextract.high.u32 %v787
    %v790 = vmul.u32 %v783, %v774
    %v791 = vadd.s32 %v786, %v788
    %vm792 = vc.u32 %v786, %v788
    %v793 = vadd.s32 %v789, 1
    %v794 = vsel %vm792, %v793, %v789
    %v795 = vadd.s32 %v790, %v794
    %v796 = vadd.s32 %v795, 536870912
    %v797 = vshrl.u32 %v796, 30
    %v798 = vshll.u32 %v797, 30
    %v799 = vsub.s32 %v795, %v798
    %vm800 = vcmp.lt.s32.totalorder %v799, 0
    %v801 = vsub.s32 0, %v799
    %v802 = vsel %vm800, %v801, %v799
    %v803 = vclz %v802
    %v804 = vsub.s32 %v803, 2
    %vm805 = vcmp.gt.s32.totalorder 0, %v804
    %v806 = vsel %vm805, 0, %v804
    %v807 = vsub.s32 32, %v806
    %v808 = vshll.u32 %v799, %v806
    %v809 = vshrl.u32 %v791, %v807
    %v810 = vor.u32 %v808, %v809
    %v811 = vsub.s32 4294967266, %v806
    %v812 = vadd.s32 %v811, 127
    %v813 = vshll.u32 %v812, 23
    %v814 = vor.u32 4788187, %v813
    %v815 = vand.u32 2147483647, %v814
    %v817 = vcvt.s32.f32 %v810
    %v818 = vmul.f32 %v817, %v815
    %v819 = vxor.u32 %v818, 2147483648
    %v820 = vsel %vm737, %v819, %v818
    %v821 = vsub.s32 4, %v797
    %v822 = vsel %vm737, %v821, %v797
    %v823 = vsel %vm736, %v717, %v820
    %v824 = vsel %vm736, 0, %v822
    %v825 = vcosq.f32.pop %v823
    %v826 = vsinq.f32.pop %v823
    %vm827 = vweird.f32 %v717
    %v828 = vadd.s32 %v824, 3
    %v829 = vand.u32 %v828, 3
    %vm830 = vcmp.lt.s32.totalorder %v829, 2
    %vm831 = vcmp.eq.s32.totalorder %v829, 0
    %v832 = vxor.u32 %v826, 2147483648
    %v833 = vsel %vm831, %v825, %v832
    %vm834 = vcmp.eq.s32.totalorder %v829, 2
    %v835 = vxor.u32 %v825, 2147483648
    %v836 = vsel %vm834, %v835, %v826
    %v837 = vsel %vm830, %v833, %v836
    %v838 = vsel %vm827, nan, %v837
    %v839 = vand.u32 2147483647, %v722
    %vm840 = vcmp.le.f32.partialorder %v839, 0.7853982
    %vm841 = vcmp.lt.s32.totalorder %v722, 0
    %v842 = vand.u32 %v722, 2139095040
    %v843 = vshrl.u32 %v842, 23
    %v844 = vsub.s32 %v843, 127
    %v845 = vand.u32 2147483647, %v722
    %v846 = vand.u32 %v845, 8388607
    %v847 = vor.u32 %v846, 8388608
    %v848 = vsub.s32 0, %v847
    %v849 = vadd.s32 %v844, 1
    %vm850 = vcmp.gt.s32.totalorder %v849, 0
    %v851 = vsel %vm850, %v849, 0
    %v852 = vshrl.u32 %v851, 5
    %v853 = vand.u32 %v851, 31
    %v854 = vsub.s32 32, %v853
    %v855 = vshrl.u32 683565275, %v854
    %v856 = vshll.u32 683565275, %v853
    %v857 = vshrl.u32 2475754826, %v854
    %v858 = vor.u32 %v856, %v857
    %v859 = vshll.u32 2475754826, %v853
    %v860 = vshrl.u32 2131351028, %v854
    %v861 = vor.u32 %v859, %v860
    %v862 = vshll.u32 2131351028, %v853
    %v863 = vshrl.u32 2102212464, %v854
    %v864 = vor.u32 %v862, %v863
    %v865 = vshll.u32 2102212464, %v853
    %v866 = vshrl.u32 920167782, %v854
    %v867 = vor.u32 %v865, %v866
    %v868 = vshll.u32 920167782, %v853
    %v869 = vshrl.u32 1326507024, %v854
    %v870 = vor.u32 %v868, %v869
    %vm871 = vcmp.lt.s32.totalorder %v852, 1
    %vm872 = vcmp.lt.s32.totalorder %v852, 2
    %vm873 = vcmp.lt.s32.totalorder %v852, 3
    %vm874 = vcmp.lt.s32.totalorder %v852, 4
    %v875 = vsel %vm871, %v855, %v858
    %v876 = vsel %vm874, %v864, 2102212464
    %v877 = vsel %vm873, %v861, %v876
    %v878 = vsel %vm872, %v875, %v877
    %v879 = vsel %vm871, %v858, %v861
    %v880 = vsel %vm874, %v867, 920167782
    %v881 = vsel %vm873, %v864, %v880
    %v882 = vsel %vm872, %v879, %v881
    %v883 = vsel %vm871, %v861, %v864
    %v884 = vsel %vm874, %v870, 1326507024
    %v885 = vsel %vm873, %v867, %v884
    %v886 = vsel %vm872, %v883, %v885
    %v887 = vshll.u32 %v847, 8
    %v888 = vmul.u32.u64.compose %v887, %v886
    %v889 = vextract.low.u32 %v888
    %v890 = vextract.high.u32 %v888
    %v891 = vmul.u32.u64.compose %v887, %v882
    %v892 = vextract.low.u32 %v891
    %v893 = vextract.high.u32 %v891
    %v894 = vmul.u32 %v887, %v878
    %v895 = vadd.s32 %v890, %v892
    %vm896 = vc.u32 %v890, %v892
    %v897 = vadd.s32 %v893, 1
    %v898 = vsel %vm896, %v897, %v893
    %v899 = vadd.s32 %v894, %v898
    %v900 = vadd.s32 %v899, 536870912
    %v901 = vshrl.u32 %v900, 30
    %v902 = vshll.u32 %v901, 30
    %v903 = vsub.s32 %v899, %v902
    %vm904 = vcmp.lt.s32.totalorder %v903, 0
    %v905 = vsub.s32 0, %v903
    %v906 = vsel %vm904, %v905, %v903
    %v907 = vclz %v906
    %v908 = vsub.s32 %v907, 2
    %vm909 = vcmp.gt.s32.totalorder 0, %v908
    %v910 = vsel %vm909, 0, %v908
    %v911 = vsub.s32 32, %v910
    %v912 = vshll.u32 %v903, %v910
    %v913 = vshrl.u32 %v895, %v911
    %v914 = vor.u32 %v912, %v913
    %v915 = vsub.s32 4294967266, %v910
    %v916 = vadd.s32 %v915, 127
    %v917 = vshll.u32 %v916, 23
    %v918 = vor.u32 4788187, %v917
    %v919 = vand.u32 2147483647, %v918
    %v921 = vcvt.s32.f32 %v914
    %v922 = vmul.f32 %v921, %v919
    %v923 = vxor.u32 %v922, 2147483648
    %v924 = vsel %vm841, %v923, %v922
    %v925 = vsub.s32 4, %v901
    %v926 = vsel %vm841, %v925, %v901
    %v927 = vsel %vm840, %v722, %v924
    %v928 = vsel %vm840, 0, %v926
    %v929 = vcosq.f32.pop %v927
    %v930 = vsinq.f32.pop %v927
    %vm931 = vweird.f32 %v722
    %v932 = vadd.s32 %v928, 3
    %v933 = vand.u32 %v932, 3
    %vm934 = vcmp.lt.s32.totalorder %v933, 2
    %vm935 = vcmp.eq.s32.totalorder %v933, 0
    %v936 = vxor.u32 %v930, 2147483648
    %v937 = vsel %vm935, %v929, %v936
    %vm938 = vcmp.eq.s32.totalorder %v933, 2
    %v939 = vxor.u32 %v929, 2147483648
    %v940 = vsel %vm938, %v939, %v930
    %v941 = vsel %vm934, %v937, %v940
    %v942 = vsel %vm931, nan, %v941
    %v943 = vand.u32 2147483647, %v727
    %vm944 = vcmp.le.f32.partialorder %v943, 0.7853982
    %vm945 = vcmp.lt.s32.totalorder %v727, 0
    %v946 = vand.u32 %v727, 2139095040
    %v947 = vshrl.u32 %v946, 23
    %v948 = vsub.s32 %v947, 127
    %v949 = vand.u32 2147483647, %v727
    %v950 = vand.u32 %v949, 8388607
    %v951 = vor.u32 %v950, 8388608
    %v952 = vsub.s32 0, %v951
    %v953 = vadd.s32 %v948, 1
    %vm954 = vcmp.gt.s32.totalorder %v953, 0
    %v955 = vsel %vm954, %v953, 0
    %v956 = vshrl.u32 %v955, 5
    %v957 = vand.u32 %v955, 31
    %v958 = vsub.s32 32, %v957
    %v959 = vshrl.u32 683565275, %v958
    %v960 = vshll.u32 683565275, %v957
    %v961 = vshrl.u32 2475754826, %v958
    %v962 = vor.u32 %v960, %v961
    %v963 = vshll.u32 2475754826, %v957
    %v964 = vshrl.u32 2131351028, %v958
    %v965 = vor.u32 %v963, %v964
    %v966 = vshll.u32 2131351028, %v957
    %v967 = vshrl.u32 2102212464, %v958
    %v968 = vor.u32 %v966, %v967
    %v969 = vshll.u32 2102212464, %v957
    %v970 = vshrl.u32 920167782, %v958
    %v971 = vor.u32 %v969, %v970
    %v972 = vshll.u32 920167782, %v957
    %v973 = vshrl.u32 1326507024, %v958
    %v974 = vor.u32 %v972, %v973
    %vm975 = vcmp.lt.s32.totalorder %v956, 1
    %vm976 = vcmp.lt.s32.totalorder %v956, 2
    %vm977 = vcmp.lt.s32.totalorder %v956, 3
    %vm978 = vcmp.lt.s32.totalorder %v956, 4
    %v979 = vsel %vm975, %v959, %v962
    %v980 = vsel %vm978, %v968, 2102212464
    %v981 = vsel %vm977, %v965, %v980
    %v982 = vsel %vm976, %v979, %v981
    %v983 = vsel %vm975, %v962, %v965
    %v984 = vsel %vm978, %v971, 920167782
    %v985 = vsel %vm977, %v968, %v984
    %v986 = vsel %vm976, %v983, %v985
    %v987 = vsel %vm975, %v965, %v968
    %v988 = vsel %vm978, %v974, 1326507024
    %v989 = vsel %vm977, %v971, %v988
    %v990 = vsel %vm976, %v987, %v989
    %v991 = vshll.u32 %v951, 8
    %v992 = vmul.u32.u64.compose %v991, %v990
    %v993 = vextract.low.u32 %v992
    %v994 = vextract.high.u32 %v992
    %v995 = vmul.u32.u64.compose %v991, %v986
    %v996 = vextract.low.u32 %v995
    %v997 = vextract.high.u32 %v995
    %v998 = vmul.u32 %v991, %v982
    %v999 = vadd.s32 %v994, %v996
    %vm1000 = vc.u32 %v994, %v996
    %v1001 = vadd.s32 %v997, 1
    %v1002 = vsel %vm1000, %v1001, %v997
    %v1003 = vadd.s32 %v998, %v1002
    %v1004 = vadd.s32 %v1003, 536870912
    %v1005 = vshrl.u32 %v1004, 30
    %v1006 = vshll.u32 %v1005, 30
    %v1007 = vsub.s32 %v1003, %v1006
    %vm1008 = vcmp.lt.s32.totalorder %v1007, 0
    %v1009 = vsub.s32 0, %v1007
    %v1010 = vsel %vm1008, %v1009, %v1007
    %v1011 = vclz %v1010
    %v1012 = vsub.s32 %v1011, 2
    %vm1013 = vcmp.gt.s32.totalorder 0, %v1012
    %v1014 = vsel %vm1013, 0, %v1012
    %v1015 = vsub.s32 32, %v1014
    %v1016 = vshll.u32 %v1007, %v1014
    %v1017 = vshrl.u32 %v999, %v1015
    %v1018 = vor.u32 %v1016, %v1017
    %v1019 = vsub.s32 4294967266, %v1014
    %v1020 = vadd.s32 %v1019, 127
    %v1021 = vshll.u32 %v1020, 23
    %v1022 = vor.u32 4788187, %v1021
    %v1023 = vand.u32 2147483647, %v1022
    %v1025 = vcvt.s32.f32 %v1018
    %v1026 = vmul.f32 %v1025, %v1023
    %v1027 = vxor.u32 %v1026, 2147483648
    %v1028 = vsel %vm945, %v1027, %v1026
    %v1029 = vsub.s32 4, %v1005
    %v1030 = vsel %vm945, %v1029, %v1005
    %v1031 = vsel %vm944, %v727, %v1028
    %v1032 = vsel %vm944, 0, %v1030
    %v1033 = vcosq.f32.pop %v1031
    %v1034 = vsinq.f32.pop %v1031
    %vm1035 = vweird.f32 %v727
    %v1036 = vadd.s32 %v1032, 3
    %v1037 = vand.u32 %v1036, 3
    %vm1038 = vcmp.lt.s32.totalorder %v1037, 2
    %vm1039 = vcmp.eq.s32.totalorder %v1037, 0
    %v1040 = vxor.u32 %v1034, 2147483648
    %v1041 = vsel %vm1039, %v1033, %v1040
    %vm1042 = vcmp.eq.s32.totalorder %v1037, 2
    %v1043 = vxor.u32 %v1033, 2147483648
    %v1044 = vsel %vm1042, %v1043, %v1034
    %v1045 = vsel %vm1038, %v1041, %v1044
    %v1046 = vsel %vm1035, nan, %v1045
    %v1047 = vand.u32 2147483647, %v732
    %vm1048 = vcmp.le.f32.partialorder %v1047, 0.7853982
    %vm1049 = vcmp.lt.s32.totalorder %v732, 0
    %v1050 = vand.u32 %v732, 2139095040
    %v1051 = vshrl.u32 %v1050, 23
    %v1052 = vsub.s32 %v1051, 127
    %v1053 = vand.u32 2147483647, %v732
    %v1054 = vand.u32 %v1053, 8388607
    %v1055 = vor.u32 %v1054, 8388608
    %v1056 = vsub.s32 0, %v1055
    %v1057 = vadd.s32 %v1052, 1
    %vm1058 = vcmp.gt.s32.totalorder %v1057, 0
    %v1059 = vsel %vm1058, %v1057, 0
    %v1060 = vshrl.u32 %v1059, 5
    %v1061 = vand.u32 %v1059, 31
    %v1062 = vsub.s32 32, %v1061
    %v1063 = vshrl.u32 683565275, %v1062
    %v1064 = vshll.u32 683565275, %v1061
    %v1065 = vshrl.u32 2475754826, %v1062
    %v1066 = vor.u32 %v1064, %v1065
    %v1067 = vshll.u32 2475754826, %v1061
    %v1068 = vshrl.u32 2131351028, %v1062
    %v1069 = vor.u32 %v1067, %v1068
    %v1070 = vshll.u32 2131351028, %v1061
    %v1071 = vshrl.u32 2102212464, %v1062
    %v1072 = vor.u32 %v1070, %v1071
    %v1073 = vshll.u32 2102212464, %v1061
    %v1074 = vshrl.u32 920167782, %v1062
    %v1075 = vor.u32 %v1073, %v1074
    %v1076 = vshll.u32 920167782, %v1061
    %v1077 = vshrl.u32 1326507024, %v1062
    %v1078 = vor.u32 %v1076, %v1077
    %vm1079 = vcmp.lt.s32.totalorder %v1060, 1
    %vm1080 = vcmp.lt.s32.totalorder %v1060, 2
    %vm1081 = vcmp.lt.s32.totalorder %v1060, 3
    %vm1082 = vcmp.lt.s32.totalorder %v1060, 4
    %v1083 = vsel %vm1079, %v1063, %v1066
    %v1084 = vsel %vm1082, %v1072, 2102212464
    %v1085 = vsel %vm1081, %v1069, %v1084
    %v1086 = vsel %vm1080, %v1083, %v1085
    %v1087 = vsel %vm1079, %v1066, %v1069
    %v1088 = vsel %vm1082, %v1075, 920167782
    %v1089 = vsel %vm1081, %v1072, %v1088
    %v1090 = vsel %vm1080, %v1087, %v1089
    %v1091 = vsel %vm1079, %v1069, %v1072
    %v1092 = vsel %vm1082, %v1078, 1326507024
    %v1093 = vsel %vm1081, %v1075, %v1092
    %v1094 = vsel %vm1080, %v1091, %v1093
    %v1095 = vshll.u32 %v1055, 8
    %v1096 = vmul.u32.u64.compose %v1095, %v1094
    %v1097 = vextract.low.u32 %v1096
    %v1098 = vextract.high.u32 %v1096
    %v1099 = vmul.u32.u64.compose %v1095, %v1090
    %v1100 = vextract.low.u32 %v1099
    %v1101 = vextract.high.u32 %v1099
    %v1102 = vmul.u32 %v1095, %v1086
    %v1103 = vadd.s32 %v1098, %v1100
    %vm1104 = vc.u32 %v1098, %v1100
    %v1105 = vadd.s32 %v1101, 1
    %v1106 = vsel %vm1104, %v1105, %v1101
    %v1107 = vadd.s32 %v1102, %v1106
    %v1108 = vadd.s32 %v1107, 536870912
    %v1109 = vshrl.u32 %v1108, 30
    %v1110 = vshll.u32 %v1109, 30
    %v1111 = vsub.s32 %v1107, %v1110
    %vm1112 = vcmp.lt.s32.totalorder %v1111, 0
    %v1113 = vsub.s32 0, %v1111
    %v1114 = vsel %vm1112, %v1113, %v1111
    %v1115 = vclz %v1114
    %v1116 = vsub.s32 %v1115, 2
    %vm1117 = vcmp.gt.s32.totalorder 0, %v1116
    %v1118 = vsel %vm1117, 0, %v1116
    %v1119 = vsub.s32 32, %v1118
    %v1120 = vshll.u32 %v1111, %v1118
    %v1121 = vshrl.u32 %v1103, %v1119
    %v1122 = vor.u32 %v1120, %v1121
    %v1123 = vsub.s32 4294967266, %v1118
    %v1124 = vadd.s32 %v1123, 127
    %v1125 = vshll.u32 %v1124, 23
    %v1126 = vor.u32 4788187, %v1125
    %v1127 = vand.u32 2147483647, %v1126
    %v1129 = vcvt.s32.f32 %v1122
    %v1130 = vmul.f32 %v1129, %v1127
    %v1131 = vxor.u32 %v1130, 2147483648
    %v1132 = vsel %vm1049, %v1131, %v1130
    %v1133 = vsub.s32 4, %v1109
    %v1134 = vsel %vm1049, %v1133, %v1109
    %v1135 = vsel %vm1048, %v732, %v1132
    %v1136 = vsel %vm1048, 0, %v1134
    %v1137 = vcosq.f32.pop %v1135
    %v1138 = vsinq.f32.pop %v1135
    %vm1139 = vweird.f32 %v732
    %v1140 = vadd.s32 %v1136, 3
    %v1141 = vand.u32 %v1140, 3
    %vm1142 = vcmp.lt.s32.totalorder %v1141, 2
    %vm1143 = vcmp.eq.s32.totalorder %v1141, 0
    %v1144 = vxor.u32 %v1138, 2147483648
    %v1145 = vsel %vm1143, %v1137, %v1144
    %vm1146 = vcmp.eq.s32.totalorder %v1141, 2
    %v1147 = vxor.u32 %v1137, 2147483648
    %v1148 = vsel %vm1146, %v1147, %v1138
    %v1149 = vsel %vm1142, %v1145, %v1148
    %v1150 = vsel %vm1139, nan, %v1149
    %1151 = vst [vmem:[%s7] sm:$0xff] %v838
    %1152 = vst [vmem:[%s7 + $0x8] sm:$0xff] %v942
    %1153 = vst [vmem:[%s7 + $0x10] sm:$0xff] %v1046
    %1154 = vst [vmem:[%s7 + $0x18] sm:$0xff] %v1150
    // Predicated region
    $region38: #{siren_fcn_forward.1} parent=1 // pred_check
      _
    $region39: #{siren_fcn_forward.1} parent=1 // pred_check_branch
      %1156 = sbr.rel (0) target = $region41
    $region40: #{siren_fcn_forward.1} parent=1 // pred_region
      _
    $region41: #{siren_fcn_forward.1} parent=1 // pred_fallthru
      _
    // Predicated region
    $region42: #{siren_fcn_forward.1} parent=1 // pred_check
      _
    $region43: #{siren_fcn_forward.1} parent=1 // pred_check_branch
      %1158 = sbr.rel (0) target = $region45
    $region44: #{siren_fcn_forward.1} parent=1 // pred_region
      _
    $region45: #{siren_fcn_forward.1} parent=1 // pred_fallthru
      _
    %1159 = vsyncpa [#allocation3], 1
    %1160 = vsyncpa [#allocation5], 1

</llo_original>
